<compile_context>
chip_gen: v7x
topology: tpu7x:2x2x1
jax: 0.10.0
libtpu: 0.0.40
codegen_flags: <defaults>
</compile_context>

<pallas_src>
import jax
import jax.numpy as jnp
from jax.experimental import pallas as pl
from jax.experimental.pallas import tpu as pltpu

_LANE = 128
_BF16_SUBLANE = 16            # bf16 packs 16 sublanes per vreg
_VMEM_BUDGET = 24 << 20       # target working set; fits every chip's scoped VMEM
_W1_TILE_BYTES = 8 << 20      # cap on the double-buffered (TK, Hp) bf16 W1 tile


def _round_up(n, m):
    return (n + m - 1) // m * m


def _cdiv(a, b):
    return -(-a // b)


def _plan_k(K, Hp):
    """Choose the K (reduction) tile so the double-buffered (TK, Hp) bf16 W1
    tile stays under _W1_TILE_BYTES.  Returns (Kp, TK) with Kp = TK * num_k."""
    Kp = _round_up(K, _LANE)
    tk_max = max(_LANE, (_W1_TILE_BYTES // (2 * 2 * Hp)) // _LANE * _LANE)
    num_k = _cdiv(Kp, tk_max)
    TK = _round_up(_cdiv(Kp, num_k), _LANE)
    return TK * num_k, TK


def _plan_batch(B, TK, Hp, Cp):
    """Largest batch tile (multiple of 16, up to 512) whose working set fits
    the VMEM budget.  x is budgeted at 4 B/elem (worst case: f32 fed directly)."""
    Bp = _round_up(max(B, 1), _BF16_SUBLANE)
    fixed = 2 * TK * Hp * 2 + 2 * Hp * Cp * 2 + 4 * (Hp + Cp) * 4
    TB = _BF16_SUBLANE
    for cand in (512, 256, 128, 64, 32, 16):
        per_b = 2 * cand * TK * 4 + 2 * cand * Cp * 4 + cand * Hp * 4
        if fixed + per_b <= _VMEM_BUDGET:
            TB = cand
            break
    if TB >= Bp:
        TB = Bp                       # single batch tile
    else:
        Bp = _round_up(Bp, TB)
    return Bp, TB


def _mlp_kernel(x_ref, w1_ref, b1_ref, w2_ref, b2_ref, o_ref, acc_ref):
    k = pl.program_id(1)

    @pl.when(k == 0)
    def _():
        acc_ref[...] = jnp.zeros_like(acc_ref)

    # Partial hidden = x_tile @ W1_tile: bf16 operands, f32 MXU accumulation.
    acc_ref[...] += jnp.dot(x_ref[...].astype(jnp.bfloat16), w1_ref[...],
                            preferred_element_type=jnp.float32)

    @pl.when(k == pl.num_programs(1) - 1)
    def _():
        h = jnp.maximum(acc_ref[...] + b1_ref[...], 0.0)        # bias + ReLU (f32 VPU)
        out = jnp.dot(h.astype(jnp.bfloat16), w2_ref[...],
                      preferred_element_type=jnp.float32)
        o_ref[...] = (out + b2_ref[...]).astype(o_ref.dtype)


def prepare_mlp_params(w1, b1, w2, b2):
    """One-time prep (call at init, reuse across forward calls): zero-pad to
    lane multiples and cast weights to bf16.  w1: (in, hidden), b1: (hidden,),
    w2: (hidden, classes), b2: (classes,)."""
    K, Hd = w1.shape
    C = w2.shape[1]
    Hp = _round_up(Hd, _LANE)
    Cp = _round_up(C, _LANE)
    Kp, TK = _plan_k(K, Hp)
    w1p = jnp.zeros((Kp, Hp), jnp.bfloat16).at[:K, :Hd].set(w1.astype(jnp.bfloat16))
    b1p = jnp.zeros((1, Hp), jnp.float32).at[0, :Hd].set(b1.reshape(-1))
    w2p = jnp.zeros((Hp, Cp), jnp.bfloat16).at[:Hd, :C].set(w2.astype(jnp.bfloat16))
    b2p = jnp.zeros((1, Cp), jnp.float32).at[0, :C].set(b2.reshape(-1))
    return dict(w1=w1p, b1=b1p, w2=w2p, b2=b2p,
                K=K, Kp=Kp, TK=TK, Hd=Hd, Hp=Hp, C=C, Cp=Cp)


def mlp_classifier_forward(x_nchw, params):
    """x_nchw: (B, 3, H, W) float32.  params: output of prepare_mlp_params.
    Returns logits (B, num_classes) float32."""
    B = x_nchw.shape[0]
    K, Kp, TK = params["K"], params["Kp"], params["TK"]
    Hp, Cp, C = params["Hp"], params["Cp"], params["C"]

    x2d = x_nchw.reshape(B, -1)                   # same as torch x.view(b, -1)
    assert x2d.shape[1] == K, (x2d.shape, K)

    Bp, TB = _plan_batch(B, TK, Hp, Cp)

    if Bp != B or Kp != K:
        # Fused cast + pad: single extra pass, writes bf16 (half of f32 bytes).
        xp = jnp.pad(x2d.astype(jnp.bfloat16), ((0, Bp - B), (0, Kp - K)))
    else:
        # Already aligned: feed f32 directly, cast to bf16 inside the kernel
        # (saves a separate wrapper cast pass over the activations).
        xp = x2d

    grid = (Bp // TB, Kp // TK)
    flops = 2 * Bp * (Kp * Hp + Hp * Cp)
    bytes_accessed = (xp.size * xp.dtype.itemsize
                      + params["w1"].size * 2 + params["w2"].size * 2
                      + (Hp + Cp) * 4 + Bp * Cp * 4)

    # Note: on v7x with very large input_dim, pipeline_mode=pl.Buffered(1) on
    # the resident W2/bias specs would free a little more VMEM; the K-tiling
    # above already keeps the working set well under the 32 MiB limit.
    out_padded = pl.pallas_call(
        _mlp_kernel,
        out_shape=jax.ShapeDtypeStruct((Bp, Cp), jnp.float32),
        grid=grid,
        in_specs=[
            pl.BlockSpec((TB, TK), lambda i, k: (i, k)),   # x streams over (batch, K)
            pl.BlockSpec((TK, Hp), lambda i, k: (k, 0)),   # W1 streams over K
            pl.BlockSpec((1, Hp), lambda i, k: (0, 0)),    # b1 / W2 / b2 stay resident
            pl.BlockSpec((Hp, Cp), lambda i, k: (0, 0)),
            pl.BlockSpec((1, Cp), lambda i, k: (0, 0)),
        ],
        out_specs=pl.BlockSpec((TB, Cp), lambda i, k: (i, 0)),
        scratch_shapes=[pltpu.VMEM((TB, Hp), jnp.float32)],
        compiler_params=pltpu.CompilerParams(
            dimension_semantics=("parallel", "arbitrary"),
            vmem_limit_bytes=32 * 1024 * 1024),
        cost_estimate=pl.CostEstimate(
            flops=flops, transcendentals=0, bytes_accessed=bytes_accessed),
    )(xp, params["w1"], params["b1"], params["w2"], params["b2"])

    return out_padded[:B, :C]


def init_params(key, input_dim, hidden_dim, num_classes):
    """Deterministic synthetic init matching nn.Linear's default (weights stored
    transposed vs. torch: (in, out))."""
    k1, k2, k3, k4 = jax.random.split(key, 4)
    lim1 = 1.0 / jnp.sqrt(input_dim)
    lim2 = 1.0 / jnp.sqrt(hidden_dim)
    w1 = jax.random.uniform(k1, (input_dim, hidden_dim), jnp.float32, -lim1, lim1)
    b1 = jax.random.uniform(k2, (hidden_dim,), jnp.float32, -lim1, lim1)
    w2 = jax.random.uniform(k3, (hidden_dim, num_classes), jnp.float32, -lim2, lim2)
    b2 = jax.random.uniform(k4, (num_classes,), jnp.float32, -lim2, lim2)
    return w1, b1, w2, b2


if __name__ == "__main__":
    # Small shapes consistent with the module's forward: NCHW image input.
    B, C_in, H, W = 2, 3, 16, 16
    hidden_dim, num_classes = 32, 6
    input_dim = C_in * H * W

    key = jax.random.PRNGKey(0)
    kx, kp = jax.random.split(key)
    x = jax.random.normal(kx, (B, C_in, H, W), dtype=jnp.float32)
    w1, b1, w2, b2 = init_params(kp, input_dim, hidden_dim, num_classes)

    params = prepare_mlp_params(w1, b1, w2, b2)        # one-time (hoisted) prep
    logits = mlp_classifier_forward(x, params)
    logits = jax.block_until_ready(logits)
    assert logits.shape == (B, num_classes)

    # Reference: same math in plain JAX with the same bf16-operand / f32-accum
    # casts the kernel performs.
    x2d = x.reshape(B, -1)
    h_ref = jnp.maximum(
        jnp.dot(x2d.astype(jnp.bfloat16), w1.astype(jnp.bfloat16),
                preferred_element_type=jnp.float32) + b1, 0.0)
    ref = jnp.dot(h_ref.astype(jnp.bfloat16), w2.astype(jnp.bfloat16),
                  preferred_element_type=jnp.float32) + b2
    assert jnp.allclose(logits, ref, atol=1e-2, rtol=1e-2), (
        jnp.max(jnp.abs(logits - ref)))

    # Looser sanity check against the pure-f32 torch-equivalent math.
    ref_f32 = jnp.maximum(x2d @ w1 + b1, 0.0) @ w2 + b2
    assert jnp.allclose(logits, ref_f32, atol=5e-2, rtol=5e-2)

    print("KERNEL_OK")
</pallas_src>

<mosaic_0001>
module attributes {stable_mosaic.version = 11 : i64} {
  func.func @_mlp_kernel(%arg0: i32, %arg1: i32, %arg2: memref<16x768xbf16, #tpu.memory_space<vmem>>, %arg3: memref<768x128xbf16, #tpu.memory_space<vmem>>, %arg4: memref<1x128xf32, #tpu.memory_space<vmem>>, %arg5: memref<128x128xbf16, #tpu.memory_space<vmem>>, %arg6: memref<1x128xf32, #tpu.memory_space<vmem>>, %arg7: memref<16x128xf32, #tpu.memory_space<vmem>>, %arg8: memref<16x128xf32, #tpu.memory_space<vmem>>) attributes {dimension_semantics = [#tpu.dimension_semantics<parallel>, #tpu.dimension_semantics<arbitrary>], iteration_bounds = array<i64: 1, 1>, scalar_prefetch = 0 : i64, scratch_operands = 1 : i64, tpu.core_type = #tpu.core_type<tc>, window_params = [{transform_indices = @transform_0, window_bounds = array<i64: 16, 768>}, {transform_indices = @transform_1, window_bounds = array<i64: 768, 128>}, {pipeline_mode = #tpu.pipeline_mode<synchronous>, transform_indices = @transform_2, window_bounds = array<i64: 1, 128>}, {pipeline_mode = #tpu.pipeline_mode<synchronous>, transform_indices = @transform_3, window_bounds = array<i64: 128, 128>}, {pipeline_mode = #tpu.pipeline_mode<synchronous>, transform_indices = @transform_4, window_bounds = array<i64: 1, 128>}, {transform_indices = @transform_5, window_bounds = array<i64: 16, 128>}]} {
    %c0_i32 = arith.constant 0 : i32
    %0 = arith.cmpi eq, %arg1, %c0_i32 : i32
    %1 = arith.extui %0 : i1 to i32
    %c0_i32_0 = arith.constant 0 : i32
    %2 = arith.cmpi ne, %1, %c0_i32_0 : i32
    scf.if %2 {
      %cst_10 = arith.constant 0.000000e+00 : f32
      %12 = vector.broadcast %cst_10 : f32 to vector<16x128xf32>
      %c0_11 = arith.constant 0 : index
      %c0_12 = arith.constant 0 : index
      %13 = vector.load %arg8[%c0_11, %c0_12] : memref<16x128xf32, #tpu.memory_space<vmem>>, vector<16x128xf32>
      tpu.vector_store %arg8[%c0_11, %c0_12], %12 {strides = array<i32>} : memref<16x128xf32, #tpu.memory_space<vmem>>, vector<16x128xf32>,
    } else {
    }
    %c0 = arith.constant 0 : index
    %c0_1 = arith.constant 0 : index
    %3 = vector.load %arg8[%c0, %c0_1] : memref<16x128xf32, #tpu.memory_space<vmem>>, vector<16x128xf32>
    %c0_2 = arith.constant 0 : index
    %c0_3 = arith.constant 0 : index
    %4 = vector.load %arg2[%c0_2, %c0_3] : memref<16x768xbf16, #tpu.memory_space<vmem>>, vector<16x768xbf16>
    %c0_4 = arith.constant 0 : index
    %c0_5 = arith.constant 0 : index
    %5 = vector.load %arg3[%c0_4, %c0_5] : memref<768x128xbf16, #tpu.memory_space<vmem>>, vector<768x128xbf16>
    %cst = arith.constant dense<0.000000e+00> : vector<16x128xf32>
    %6 = tpu.matmul %4, %5, %cst {dimension_numbers = #tpu.dot_dimension_numbers<[1], [0], [0], [1], [0, 0, 1, 1], [], []>} : vector<16x768xbf16>, vector<768x128xbf16>, vector<16x128xf32> -> vector<16x128xf32>
    %7 = arith.addf %3, %6 : vector<16x128xf32>
    %c0_6 = arith.constant 0 : index
    %c0_7 = arith.constant 0 : index
    %8 = vector.load %arg8[%c0_6, %c0_7] : memref<16x128xf32, #tpu.memory_space<vmem>>, vector<16x128xf32>
    tpu.vector_store %arg8[%c0_6, %c0_7], %7 {strides = array<i32>} : memref<16x128xf32, #tpu.memory_space<vmem>>, vector<16x128xf32>,
    %c0_i32_8 = arith.constant 0 : i32
    %9 = arith.cmpi eq, %arg1, %c0_i32_8 : i32
    %10 = arith.extui %9 : i1 to i32
    %c0_i32_9 = arith.constant 0 : i32
    %11 = arith.cmpi ne, %10, %c0_i32_9 : i32
    scf.if %11 {
      %c0_10 = arith.constant 0 : index
      %c0_11 = arith.constant 0 : index
      %12 = vector.load %arg8[%c0_10, %c0_11] : memref<16x128xf32, #tpu.memory_space<vmem>>, vector<16x128xf32>
      %c0_12 = arith.constant 0 : index
      %c0_13 = arith.constant 0 : index
      %13 = vector.load %arg4[%c0_12, %c0_13] : memref<1x128xf32, #tpu.memory_space<vmem>>, vector<1x128xf32>
      %14 = vector.broadcast %13 : vector<1x128xf32> to vector<16x128xf32>
      %15 = arith.addf %12, %14 : vector<16x128xf32>
      %cst_14 = arith.constant 0.000000e+00 : f32
      %16 = vector.broadcast %cst_14 : f32 to vector<16x128xf32>
      %17 = arith.maximumf %15, %16 : vector<16x128xf32>
      %18 = arith.truncf %17 : vector<16x128xf32> to vector<16x128xbf16>
      %c0_15 = arith.constant 0 : index
      %c0_16 = arith.constant 0 : index
      %19 = vector.load %arg5[%c0_15, %c0_16] : memref<128x128xbf16, #tpu.memory_space<vmem>>, vector<128x128xbf16>
      %cst_17 = arith.constant dense<0.000000e+00> : vector<16x128xf32>
      %20 = tpu.matmul %18, %19, %cst_17 {dimension_numbers = #tpu.dot_dimension_numbers<[1], [0], [0], [1], [0, 0, 1, 1], [], []>} : vector<16x128xbf16>, vector<128x128xbf16>, vector<16x128xf32> -> vector<16x128xf32>
      %c0_18 = arith.constant 0 : index
      %c0_19 = arith.constant 0 : index
      %21 = vector.load %arg6[%c0_18, %c0_19] : memref<1x128xf32, #tpu.memory_space<vmem>>, vector<1x128xf32>
      %22 = vector.broadcast %21 : vector<1x128xf32> to vector<16x128xf32>
      %23 = arith.addf %20, %22 : vector<16x128xf32>
      %c0_20 = arith.constant 0 : index
      %c0_21 = arith.constant 0 : index
      %24 = vector.load %arg7[%c0_20, %c0_21] : memref<16x128xf32, #tpu.memory_space<vmem>>, vector<16x128xf32>
      tpu.vector_store %arg7[%c0_20, %c0_21], %23 {strides = array<i32>} : memref<16x128xf32, #tpu.memory_space<vmem>>, vector<16x128xf32>,
    } else {
    }
    return
  }
  func.func @transform_0(%arg0: i32, %arg1: i32) -> (i32, i32) {
    %c0_i32 = arith.constant 0 : i32
    return %arg0, %arg1 : i32, i32
  }
  func.func @transform_1(%arg0: i32, %arg1: i32) -> (i32, i32) {
    %c0_i32 = arith.constant 0 : i32
    %c0_i32_0 = arith.constant 0 : i32
    return %arg1, %c0_i32 : i32, i32
  }
  func.func @transform_2(%arg0: i32, %arg1: i32) -> (i32, i32) {
    %c0_i32 = arith.constant 0 : i32
    %c0_i32_0 = arith.constant 0 : i32
    %c0_i32_1 = arith.constant 0 : i32
    return %c0_i32, %c0_i32_0 : i32, i32
  }
  func.func @transform_3(%arg0: i32, %arg1: i32) -> (i32, i32) {
    %c0_i32 = arith.constant 0 : i32
    %c0_i32_0 = arith.constant 0 : i32
    %c0_i32_1 = arith.constant 0 : i32
    return %c0_i32, %c0_i32_0 : i32, i32
  }
  func.func @transform_4(%arg0: i32, %arg1: i32) -> (i32, i32) {
    %c0_i32 = arith.constant 0 : i32
    %c0_i32_0 = arith.constant 0 : i32
    %c0_i32_1 = arith.constant 0 : i32
    return %c0_i32, %c0_i32_0 : i32, i32
  }
  func.func @transform_5(%arg0: i32, %arg1: i32) -> (i32, i32) {
    %c0_i32 = arith.constant 0 : i32
    %c0_i32_0 = arith.constant 0 : i32
    return %arg0, %c0_i32 : i32, i32
  }
}

</mosaic_0001>

<llo_original>
// kernel: tpu_custom_call.1
$region0: #{tpu_custom_call.1}
  #allocation0 [shape = 'u32[]', space=smem, size = 0x4, offset = 0x4, fixed_abs, tag = 'smem constant byte address 0x4 - core index']
  #allocation1 [shape = 'u32[144,128]{1,0:T(1,128)}', space=vmem, size = 0x12000, scoped, tag = 'internal scratch']
  #allocation2 [shape = 'f32[16,128]{1,0:T(8,128)}', space=vmem, size = 0x2000, scoped, tag = 'scratch operand']
  %s0 = inlined_call_operand.hbm [shape: bf16[16,768], index: 0, kind: input, shape index: {}]
  %s1 = inlined_call_operand.hbm [shape: bf16[768,128], index: 1, kind: input, shape index: {}]
  %s2 = inlined_call_operand.vmem [shape: f32[1,128], index: 2, kind: input, shape index: {}]
  %s3 = inlined_call_operand.hbm [shape: bf16[128,128], index: 3, kind: input, shape index: {}]
  %s4 = inlined_call_operand.vmem [shape: f32[1,128], index: 4, kind: input, shape index: {}]
  %s5 = inlined_call_operand.hbm [shape: f32[16,128], index: 5, kind: output, shape index: {}]
  %s6 = sld [smem:[#allocation0]]
  $region50: #{tpu_custom_call.1} parent=0
    _
  %s8 = ssub.s32 1, %s6
  %s9 = scalar_select 0, %s8, %s6
  $region1: #{tpu_custom_call.1} parent=0
    #allocation3 [shape = 'u8[24576]{0}', space=vmem, size = 0x6000, scoped, tag = 'input window, operand 0, single buffered']
    #allocation4 [shape = 's32[1]{0}', space=sflag, size = 0x4, scoped, tag = 'scoped memory for tpu_custom_call.1']
    #allocation5 [shape = 's32[1]{0}', space=sflag, size = 0x4, scoped, tag = 'scoped memory for tpu_custom_call.1']
    #allocation6 [shape = 'u8[196608]{0}', space=vmem, size = 0x30000, scoped, tag = 'input window, operand 1, single buffered']
    #allocation7 [shape = 's32[1]{0}', space=sflag, size = 0x4, scoped, tag = 'scoped memory for tpu_custom_call.1']
    #allocation8 [shape = 'u8[32768]{0}', space=vmem, size = 0x8000, scoped, tag = 'input window, operand 3, single buffered']
    #allocation9 [shape = 'u8[8192]{0}', space=vmem, size = 0x2000, scoped, tag = 'output window, operand 0, single buffered']
    %10 = vsyncpa [#allocation4], 0
    %11 = vsyncpa [#allocation7], 0
    %12 = vsyncpa [#allocation5], 0
    // Predicated region
    $region2: #{tpu_custom_call.1} parent=1 // pred_check
      _
    $region3: #{tpu_custom_call.1} parent=1 // pred_check_branch
      %14 = sbr.rel (0) target = $region5
    $region4: #{tpu_custom_call.1} parent=1 // pred_region
      %s16 = ssub.s32 768, 768
      %17 = vsyncadd [#allocation4], %s16
      %s18 = sshll.u32 [#allocation3], 4
      %s19 = int_to_ptr.vmem [resolvable:$true] %s18
      %24 = dma.hbm_to_vmem [thread:$0]  %s0, 768, %s19, [#allocation4], 384, 384, 24
    $region5: #{tpu_custom_call.1} parent=1 // pred_fallthru
      _
    // Predicated region
    $region6: #{tpu_custom_call.1} parent=1 // pred_check
      _
    $region7: #{tpu_custom_call.1} parent=1 // pred_check_branch
      %26 = sbr.rel (0) target = $region9
    $region8: #{tpu_custom_call.1} parent=1 // pred_region
      %s28 = ssub.s32 6144, 6144
      %29 = vsyncadd [#allocation7], %s28
      %s30 = sshll.u32 [#allocation6], 4
      %s31 = int_to_ptr.vmem [resolvable:$true] %s30
      %36 = dma.hbm_to_vmem [thread:$0]  %s1, 6144, %s31, [#allocation7], 64, 64, 4
    $region9: #{tpu_custom_call.1} parent=1 // pred_fallthru
      _
    // Predicated region
    $region10: #{tpu_custom_call.1} parent=1 // pred_check
      _
    $region11: #{tpu_custom_call.1} parent=1 // pred_check_branch
      %38 = sbr.rel (0) target = $region13
    $region12: #{tpu_custom_call.1} parent=1 // pred_region
      _
    $region13: #{tpu_custom_call.1} parent=1 // pred_fallthru
      _
    // Predicated region
    $region14: #{tpu_custom_call.1} parent=1 // pred_check
      _
    $region15: #{tpu_custom_call.1} parent=1 // pred_check_branch
      %40 = sbr.rel (0) target = $region17
    $region16: #{tpu_custom_call.1} parent=1 // pred_region
      %s42 = ssub.s32 1024, 1024
      %43 = vsyncadd [#allocation7], %s42
      %s44 = sshll.u32 [#allocation8], 4
      %s45 = int_to_ptr.vmem [resolvable:$true] %s44
      %50 = dma.hbm_to_vmem [thread:$0]  %s3, 1024, %s45, [#allocation7], 64, 64, 4
    $region17: #{tpu_custom_call.1} parent=1 // pred_fallthru
      _
    // Predicated region
    $region18: #{tpu_custom_call.1} parent=1 // pred_check
      _
    $region19: #{tpu_custom_call.1} parent=1 // pred_check_branch
      %52 = sbr.rel (0) target = $region21
    $region20: #{tpu_custom_call.1} parent=1 // pred_region
      _
    $region21: #{tpu_custom_call.1} parent=1 // pred_fallthru
      _
    // Predicated region
    $region22: #{tpu_custom_call.1} parent=1 // pred_check
      _
    $region23: #{tpu_custom_call.1} parent=1 // pred_check_branch
      %54 = sbr.rel (0) target = $region25
    $region24: #{tpu_custom_call.1} parent=1 // pred_region
      %55 = dma.done [#allocation4], 768
    $region25: #{tpu_custom_call.1} parent=1 // pred_fallthru
      _
    // Predicated region
    $region26: #{tpu_custom_call.1} parent=1 // pred_check
      _
    $region27: #{tpu_custom_call.1} parent=1 // pred_check_branch
      %57 = sbr.rel (0) target = $region29
    $region28: #{tpu_custom_call.1} parent=1 // pred_region
      %58 = dma.done [#allocation7], 6144
    $region29: #{tpu_custom_call.1} parent=1 // pred_fallthru
      _
    // Predicated region
    $region30: #{tpu_custom_call.1} parent=1 // pred_check
      _
    $region31: #{tpu_custom_call.1} parent=1 // pred_check_branch
      %60 = sbr.rel (0) target = $region33
    $region32: #{tpu_custom_call.1} parent=1 // pred_region
      %61 = dma.done [#allocation7], 1024
    $region33: #{tpu_custom_call.1} parent=1 // pred_fallthru
      _
    %p63 = scmp.eq.s32.totalorder 0, 0
    // Predicated region
    $region34: #{tpu_custom_call.1} parent=1 // pred_check
      %p64 = pneg %p63
    $region35: #{tpu_custom_call.1} parent=1 // pred_check_branch
      %66 = sbr.rel (%p64) target = $region37
    $region36: #{tpu_custom_call.1} parent=1 // pred_region
      %67 = vst [vmem:[#allocation2] sm:$0xff] 0.0
      %68 = vst [vmem:[#allocation2 + $0x8] sm:$0xff] 0.0
    $region37: #{tpu_custom_call.1} parent=1 // pred_fallthru
      _
    %v69 = vld [vmem:[#allocation2] sm:$0xff]
    %v70 = vld [vmem:[#allocation2 + $0x8] sm:$0xff]
    %v71 = vld [vmem:[#allocation3] sm:$0xff]
    %v72 = vld [vmem:[#allocation3 + $0x8] sm:$0xff]
    %v73 = vld [vmem:[#allocation3 + $0x10] sm:$0xff]
    %v74 = vld [vmem:[#allocation3 + $0x18] sm:$0xff]
    %v75 = vld [vmem:[#allocation3 + $0x20] sm:$0xff]
    %v76 = vld [vmem:[#allocation3 + $0x28] sm:$0xff]
    %v77 = vld [vmem:[#allocation6] sm:$0xf]
    %v78 = vld [vmem:[#allocation6 + $0x4] sm:$0xf]
    %v79 = vld [vmem:[#allocation6 + $0x8] sm:$0xf]
    %v80 = vld [vmem:[#allocation6 + $0xc] sm:$0xf]
    %v81 = vld [vmem:[#allocation6 + $0x10] sm:$0xf]
    %v82 = vld [vmem:[#allocation6 + $0x14] sm:$0xf]
    %v83 = vld [vmem:[#allocation6 + $0x18] sm:$0xf]
    %v84 = vld [vmem:[#allocation6 + $0x1c] sm:$0xf]
    %v85 = vld [vmem:[#allocation6 + $0x20] sm:$0xf]
    %v86 = vld [vmem:[#allocation6 + $0x24] sm:$0xf]
    %v87 = vld [vmem:[#allocation6 + $0x28] sm:$0xf]
    %v88 = vld [vmem:[#allocation6 + $0x2c] sm:$0xf]
    %v89 = vld [vmem:[#allocation6 + $0x30] sm:$0xf]
    %v90 = vld [vmem:[#allocation6 + $0x34] sm:$0xf]
    %v91 = vld [vmem:[#allocation6 + $0x38] sm:$0xf]
    %v92 = vld [vmem:[#allocation6 + $0x3c] sm:$0xf]
    %v93 = vld [vmem:[#allocation6 + $0x40] sm:$0xf]
    %v94 = vld [vmem:[#allocation6 + $0x44] sm:$0xf]
    %v95 = vld [vmem:[#allocation6 + $0x48] sm:$0xf]
    %v96 = vld [vmem:[#allocation6 + $0x4c] sm:$0xf]
    %v97 = vld [vmem:[#allocation6 + $0x50] sm:$0xf]
    %v98 = vld [vmem:[#allocation6 + $0x54] sm:$0xf]
    %v99 = vld [vmem:[#allocation6 + $0x58] sm:$0xf]
    %v100 = vld [vmem:[#allocation6 + $0x5c] sm:$0xf]
    %v101 = vld [vmem:[#allocation6 + $0x60] sm:$0xf]
    %v102 = vld [vmem:[#allocation6 + $0x64] sm:$0xf]
    %v103 = vld [vmem:[#allocation6 + $0x68] sm:$0xf]
    %v104 = vld [vmem:[#allocation6 + $0x6c] sm:$0xf]
    %v105 = vld [vmem:[#allocation6 + $0x70] sm:$0xf]
    %v106 = vld [vmem:[#allocation6 + $0x74] sm:$0xf]
    %v107 = vld [vmem:[#allocation6 + $0x78] sm:$0xf]
    %v108 = vld [vmem:[#allocation6 + $0x7c] sm:$0xf]
    %v109 = vld [vmem:[#allocation6 + $0x80] sm:$0xf]
    %v110 = vld [vmem:[#allocation6 + $0x84] sm:$0xf]
    %v111 = vld [vmem:[#allocation6 + $0x88] sm:$0xf]
    %v112 = vld [vmem:[#allocation6 + $0x8c] sm:$0xf]
    %v113 = vld [vmem:[#allocation6 + $0x90] sm:$0xf]
    %v114 = vld [vmem:[#allocation6 + $0x94] sm:$0xf]
    %v115 = vld [vmem:[#allocation6 + $0x98] sm:$0xf]
    %v116 = vld [vmem:[#allocation6 + $0x9c] sm:$0xf]
    %v117 = vld [vmem:[#allocation6 + $0xa0] sm:$0xf]
    %v118 = vld [vmem:[#allocation6 + $0xa4] sm:$0xf]
    %v119 = vld [vmem:[#allocation6 + $0xa8] sm:$0xf]
    %v120 = vld [vmem:[#allocation6 + $0xac] sm:$0xf]
    %v121 = vld [vmem:[#allocation6 + $0xb0] sm:$0xf]
    %v122 = vld [vmem:[#allocation6 + $0xb4] sm:$0xf]
    %v123 = vld [vmem:[#allocation6 + $0xb8] sm:$0xf]
    %v124 = vld [vmem:[#allocation6 + $0xbc] sm:$0xf]
    %v125 = vld [vmem:[#allocation6 + $0xc0] sm:$0xf]
    %v126 = vld [vmem:[#allocation6 + $0xc4] sm:$0xf]
    %v127 = vld [vmem:[#allocation6 + $0xc8] sm:$0xf]
    %v128 = vld [vmem:[#allocation6 + $0xcc] sm:$0xf]
    %v129 = vld [vmem:[#allocation6 + $0xd0] sm:$0xf]
    %v130 = vld [vmem:[#allocation6 + $0xd4] sm:$0xf]
    %v131 = vld [vmem:[#allocation6 + $0xd8] sm:$0xf]
    %v132 = vld [vmem:[#allocation6 + $0xdc] sm:$0xf]
    %v133 = vld [vmem:[#allocation6 + $0xe0] sm:$0xf]
    %v134 = vld [vmem:[#allocation6 + $0xe4] sm:$0xf]
    %v135 = vld [vmem:[#allocation6 + $0xe8] sm:$0xf]
    %v136 = vld [vmem:[#allocation6 + $0xec] sm:$0xf]
    %v137 = vld [vmem:[#allocation6 + $0xf0] sm:$0xf]
    %v138 = vld [vmem:[#allocation6 + $0xf4] sm:$0xf]
    %v139 = vld [vmem:[#allocation6 + $0xf8] sm:$0xf]
    %v140 = vld [vmem:[#allocation6 + $0xfc] sm:$0xf]
    %v141 = vld [vmem:[#allocation6 + $0x100] sm:$0xf]
    %v142 = vld [vmem:[#allocation6 + $0x104] sm:$0xf]
    %v143 = vld [vmem:[#allocation6 + $0x108] sm:$0xf]
    %v144 = vld [vmem:[#allocation6 + $0x10c] sm:$0xf]
    %v145 = vld [vmem:[#allocation6 + $0x110] sm:$0xf]
    %v146 = vld [vmem:[#allocation6 + $0x114] sm:$0xf]
    %v147 = vld [vmem:[#allocation6 + $0x118] sm:$0xf]
    %v148 = vld [vmem:[#allocation6 + $0x11c] sm:$0xf]
    %v149 = vld [vmem:[#allocation6 + $0x120] sm:$0xf]
    %v150 = vld [vmem:[#allocation6 + $0x124] sm:$0xf]
    %v151 = vld [vmem:[#allocation6 + $0x128] sm:$0xf]
    %v152 = vld [vmem:[#allocation6 + $0x12c] sm:$0xf]
    %v153 = vld [vmem:[#allocation6 + $0x130] sm:$0xf]
    %v154 = vld [vmem:[#allocation6 + $0x134] sm:$0xf]
    %v155 = vld [vmem:[#allocation6 + $0x138] sm:$0xf]
    %v156 = vld [vmem:[#allocation6 + $0x13c] sm:$0xf]
    %v157 = vld [vmem:[#allocation6 + $0x140] sm:$0xf]
    %v158 = vld [vmem:[#allocation6 + $0x144] sm:$0xf]
    %v159 = vld [vmem:[#allocation6 + $0x148] sm:$0xf]
    %v160 = vld [vmem:[#allocation6 + $0x14c] sm:$0xf]
    %v161 = vld [vmem:[#allocation6 + $0x150] sm:$0xf]
    %v162 = vld [vmem:[#allocation6 + $0x154] sm:$0xf]
    %v163 = vld [vmem:[#allocation6 + $0x158] sm:$0xf]
    %v164 = vld [vmem:[#allocation6 + $0x15c] sm:$0xf]
    %v165 = vld [vmem:[#allocation6 + $0x160] sm:$0xf]
    %v166 = vld [vmem:[#allocation6 + $0x164] sm:$0xf]
    %v167 = vld [vmem:[#allocation6 + $0x168] sm:$0xf]
    %v168 = vld [vmem:[#allocation6 + $0x16c] sm:$0xf]
    %v169 = vld [vmem:[#allocation6 + $0x170] sm:$0xf]
    %v170 = vld [vmem:[#allocation6 + $0x174] sm:$0xf]
    %v171 = vld [vmem:[#allocation6 + $0x178] sm:$0xf]
    %v172 = vld [vmem:[#allocation6 + $0x17c] sm:$0xf]
    %v179 = vunpack.c.l.b16 %v71
    %v180 = vunpack.c.h.b16 %v71
    %v181 = vunpack.c.l.b16 %v72
    %v182 = vunpack.c.h.b16 %v72
    %v183 = vunpack.c.l.b16 %v73
    %v184 = vunpack.c.h.b16 %v73
    %v185 = vunpack.c.l.b16 %v74
    %v186 = vunpack.c.h.b16 %v74
    %v187 = vunpack.c.l.b16 %v75
    %v188 = vunpack.c.h.b16 %v75
    %v189 = vunpack.c.l.b16 %v76
    %v190 = vunpack.c.h.b16 %v76
    %v191 = vpack.c.b16 %v185, %v179
    %v192 = vpack.c.b16 %v186, %v180
    %v193 = vpack.c.b16 %v187, %v181
    %v194 = vpack.c.b16 %v188, %v182
    %v195 = vpack.c.b16 %v189, %v183
    %v196 = vpack.c.b16 %v190, %v184
    %v299 = vunpack.c.l.b16 %v77
    %v300 = vunpack.c.l.b16 %v78
    %v301 = vunpack.c.l.b16 %v79
    %v302 = vunpack.c.l.b16 %v80
    %v303 = vunpack.c.l.b16 %v81
    %v304 = vunpack.c.l.b16 %v82
    %v305 = vunpack.c.l.b16 %v83
    %v306 = vunpack.c.l.b16 %v84
    %v307 = vunpack.c.l.b16 %v85
    %v308 = vunpack.c.l.b16 %v86
    %v309 = vunpack.c.l.b16 %v87
    %v310 = vunpack.c.l.b16 %v88
    %v311 = vunpack.c.l.b16 %v89
    %v312 = vunpack.c.l.b16 %v90
    %v313 = vunpack.c.l.b16 %v91
    %v314 = vunpack.c.l.b16 %v92
    %v315 = vunpack.c.l.b16 %v93
    %v316 = vunpack.c.l.b16 %v94
    %v317 = vunpack.c.l.b16 %v95
    %v318 = vunpack.c.l.b16 %v96
    %v319 = vunpack.c.l.b16 %v97
    %v320 = vunpack.c.l.b16 %v98
    %v321 = vunpack.c.l.b16 %v99
    %v322 = vunpack.c.l.b16 %v100
    %v323 = vunpack.c.l.b16 %v101
    %v324 = vunpack.c.l.b16 %v102
    %v325 = vunpack.c.l.b16 %v103
    %v326 = vunpack.c.l.b16 %v104
    %v327 = vunpack.c.l.b16 %v105
    %v328 = vunpack.c.l.b16 %v106
    %v329 = vunpack.c.l.b16 %v107
    %v330 = vunpack.c.l.b16 %v108
    %v331 = vunpack.c.l.b16 %v109
    %v332 = vunpack.c.l.b16 %v110
    %v333 = vunpack.c.l.b16 %v111
    %v334 = vunpack.c.l.b16 %v112
    %v335 = vunpack.c.l.b16 %v113
    %v336 = vunpack.c.l.b16 %v114
    %v337 = vunpack.c.l.b16 %v115
    %v338 = vunpack.c.l.b16 %v116
    %v339 = vunpack.c.l.b16 %v117
    %v340 = vunpack.c.l.b16 %v118
    %v341 = vunpack.c.l.b16 %v119
    %v342 = vunpack.c.l.b16 %v120
    %v343 = vunpack.c.l.b16 %v121
    %v344 = vunpack.c.l.b16 %v122
    %v345 = vunpack.c.l.b16 %v123
    %v346 = vunpack.c.l.b16 %v124
    %v347 = vunpack.c.l.b16 %v125
    %v348 = vunpack.c.l.b16 %v126
    %v349 = vunpack.c.l.b16 %v127
    %v350 = vunpack.c.l.b16 %v128
    %v351 = vunpack.c.l.b16 %v129
    %v352 = vunpack.c.l.b16 %v130
    %v353 = vunpack.c.l.b16 %v131
    %v354 = vunpack.c.l.b16 %v132
    %v355 = vunpack.c.l.b16 %v133
    %v356 = vunpack.c.l.b16 %v134
    %v357 = vunpack.c.l.b16 %v135
    %v358 = vunpack.c.l.b16 %v136
    %v359 = vunpack.c.l.b16 %v137
    %v360 = vunpack.c.l.b16 %v138
    %v361 = vunpack.c.l.b16 %v139
    %v362 = vunpack.c.l.b16 %v140
    %v363 = vunpack.c.l.b16 %v141
    %v364 = vunpack.c.l.b16 %v142
    %v365 = vunpack.c.l.b16 %v143
    %v366 = vunpack.c.l.b16 %v144
    %v367 = vunpack.c.l.b16 %v145
    %v368 = vunpack.c.l.b16 %v146
    %v369 = vunpack.c.l.b16 %v147
    %v370 = vunpack.c.l.b16 %v148
    %v371 = vunpack.c.l.b16 %v149
    %v372 = vunpack.c.l.b16 %v150
    %v373 = vunpack.c.l.b16 %v151
    %v374 = vunpack.c.l.b16 %v152
    %v375 = vunpack.c.l.b16 %v153
    %v376 = vunpack.c.l.b16 %v154
    %v377 = vunpack.c.l.b16 %v155
    %v378 = vunpack.c.l.b16 %v156
    %v379 = vunpack.c.l.b16 %v157
    %v380 = vunpack.c.l.b16 %v158
    %v381 = vunpack.c.l.b16 %v159
    %v382 = vunpack.c.l.b16 %v160
    %v383 = vunpack.c.l.b16 %v161
    %v384 = vunpack.c.l.b16 %v162
    %v385 = vunpack.c.l.b16 %v163
    %v386 = vunpack.c.l.b16 %v164
    %v387 = vunpack.c.l.b16 %v165
    %v388 = vunpack.c.l.b16 %v166
    %v389 = vunpack.c.l.b16 %v167
    %v390 = vunpack.c.l.b16 %v168
    %v391 = vunpack.c.l.b16 %v169
    %v392 = vunpack.c.l.b16 %v170
    %v393 = vunpack.c.l.b16 %v171
    %v394 = vunpack.c.l.b16 %v172
    %v395 = vpack.c.b16 %v300, %v299
    %v396 = vpack.c.b16 %v302, %v301
    %v397 = vpack.c.b16 %v304, %v303
    %v398 = vpack.c.b16 %v306, %v305
    %v399 = vpack.c.b16 %v308, %v307
    %v400 = vpack.c.b16 %v310, %v309
    %v401 = vpack.c.b16 %v312, %v311
    %v402 = vpack.c.b16 %v314, %v313
    %v403 = vpack.c.b16 %v316, %v315
    %v404 = vpack.c.b16 %v318, %v317
    %v405 = vpack.c.b16 %v320, %v319
    %v406 = vpack.c.b16 %v322, %v321
    %v407 = vpack.c.b16 %v324, %v323
    %v408 = vpack.c.b16 %v326, %v325
    %v409 = vpack.c.b16 %v328, %v327
    %v410 = vpack.c.b16 %v330, %v329
    %v411 = vpack.c.b16 %v332, %v331
    %v412 = vpack.c.b16 %v334, %v333
    %v413 = vpack.c.b16 %v336, %v335
    %v414 = vpack.c.b16 %v338, %v337
    %v415 = vpack.c.b16 %v340, %v339
    %v416 = vpack.c.b16 %v342, %v341
    %v417 = vpack.c.b16 %v344, %v343
    %v418 = vpack.c.b16 %v346, %v345
    %v419 = vpack.c.b16 %v348, %v347
    %v420 = vpack.c.b16 %v350, %v349
    %v421 = vpack.c.b16 %v352, %v351
    %v422 = vpack.c.b16 %v354, %v353
    %v423 = vpack.c.b16 %v356, %v355
    %v424 = vpack.c.b16 %v358, %v357
    %v425 = vpack.c.b16 %v360, %v359
    %v426 = vpack.c.b16 %v362, %v361
    %v427 = vpack.c.b16 %v364, %v363
    %v428 = vpack.c.b16 %v366, %v365
    %v429 = vpack.c.b16 %v368, %v367
    %v430 = vpack.c.b16 %v370, %v369
    %v431 = vpack.c.b16 %v372, %v371
    %v432 = vpack.c.b16 %v374, %v373
    %v433 = vpack.c.b16 %v376, %v375
    %v434 = vpack.c.b16 %v378, %v377
    %v435 = vpack.c.b16 %v380, %v379
    %v436 = vpack.c.b16 %v382, %v381
    %v437 = vpack.c.b16 %v384, %v383
    %v438 = vpack.c.b16 %v386, %v385
    %v439 = vpack.c.b16 %v388, %v387
    %v440 = vpack.c.b16 %v390, %v389
    %v441 = vpack.c.b16 %v392, %v391
    %v442 = vpack.c.b16 %v394, %v393
    %491 = vmatprep.subr.bf16.mxu0 0
    %492 = vmatpush1.bf16.msra.mxu0 %v395
    %493 = vmatprep.subr.bf16.mxu0 0
    %494 = vmatpush1.bf16.msra.mxu0 %v396
    %495 = vmatprep.subr.bf16.mxu0 0
    %496 = vmatpush1.bf16.msra.mxu0 %v397
    %497 = vmatprep.subr.bf16.mxu0 0
    %498 = vmatpush1.bf16.msra.mxu0 %v398
    %499 = vmatprep.subr.bf16.mxu0 0
    %500 = vmatpush1.bf16.msra.mxu0 %v399
    %501 = vmatprep.subr.bf16.mxu0 0
    %502 = vmatpush1.bf16.msra.mxu0 %v400
    %503 = vmatprep.subr.bf16.mxu0 0
    %504 = vmatpush1.bf16.msra.mxu0 %v401
    %505 = vmatprep.subr.bf16.mxu0 0
    %506 = vmatpush1.bf16.msra.mxu0 %v402
    %507 = vmatprep.subr.bf16.mxu0 0
    %508 = vmatpush1.bf16.msra.mxu0 %v403
    %509 = vmatprep.subr.bf16.mxu0 0
    %510 = vmatpush1.bf16.msra.mxu0 %v404
    %511 = vmatprep.subr.bf16.mxu0 0
    %512 = vmatpush1.bf16.msra.mxu0 %v405
    %513 = vmatprep.subr.bf16.mxu0 0
    %514 = vmatpush1.bf16.msra.mxu0 %v406
    %515 = vmatprep.subr.bf16.mxu0 0
    %516 = vmatpush1.bf16.msra.mxu0 %v407
    %517 = vmatprep.subr.bf16.mxu0 0
    %518 = vmatpush1.bf16.msra.mxu0 %v408
    %519 = vmatprep.subr.bf16.mxu0 0
    %520 = vmatpush1.bf16.msra.mxu0 %v409
    %521 = vmatprep.subr.bf16.mxu0 0
    %522 = vmatpush1.bf16.msra.mxu0 %v410
    %523 = vmatprep.mubr.bf16.mxu0 %v192
    %524 = vmatmul.mubr.bf16.gmra.mrb[0].mxu0 %v191
    %v525 = vpop.f32.mrb[0].mxu0
    %v526 = vadd.f32 0.0, %v525
    %v527 = vpop.f32.mrb[0].mxu0
    %v528 = vpop.f32.mrb[0].mxu0
    %v529 = vadd.f32 0.0, %v528
    %v530 = vpop.f32.mrb[0].mxu0
    %531 = vdwg.mxu0
    %532 = vmatprep.subr.bf16.mxu0 0
    %533 = vmatpush1.bf16.msra.mxu0 %v411
    %534 = vmatprep.subr.bf16.mxu0 0
    %535 = vmatpush1.bf16.msra.mxu0 %v412
    %536 = vmatprep.subr.bf16.mxu0 0
    %537 = vmatpush1.bf16.msra.mxu0 %v413
    %538 = vmatprep.subr.bf16.mxu0 0
    %539 = vmatpush1.bf16.msra.mxu0 %v414
    %540 = vmatprep.subr.bf16.mxu0 0
    %541 = vmatpush1.bf16.msra.mxu0 %v415
    %542 = vmatprep.subr.bf16.mxu0 0
    %543 = vmatpush1.bf16.msra.mxu0 %v416
    %544 = vmatprep.subr.bf16.mxu0 0
    %545 = vmatpush1.bf16.msra.mxu0 %v417
    %546 = vmatprep.subr.bf16.mxu0 0
    %547 = vmatpush1.bf16.msra.mxu0 %v418
    %548 = vmatprep.subr.bf16.mxu0 0
    %549 = vmatpush1.bf16.msra.mxu0 %v419
    %550 = vmatprep.subr.bf16.mxu0 0
    %551 = vmatpush1.bf16.msra.mxu0 %v420
    %552 = vmatprep.subr.bf16.mxu0 0
    %553 = vmatpush1.bf16.msra.mxu0 %v421
    %554 = vmatprep.subr.bf16.mxu0 0
    %555 = vmatpush1.bf16.msra.mxu0 %v422
    %556 = vmatprep.subr.bf16.mxu0 0
    %557 = vmatpush1.bf16.msra.mxu0 %v423
    %558 = vmatprep.subr.bf16.mxu0 0
    %559 = vmatpush1.bf16.msra.mxu0 %v424
    %560 = vmatprep.subr.bf16.mxu0 0
    %561 = vmatpush1.bf16.msra.mxu0 %v425
    %562 = vmatprep.subr.bf16.mxu0 0
    %563 = vmatpush1.bf16.msra.mxu0 %v426
    %564 = vmatprep.mubr.bf16.mxu0 %v194
    %565 = vmatmul.mubr.bf16.gmra.mrb[0].mxu0 %v193
    %v566 = vpop.f32.mrb[0].mxu0
    %v567 = vadd.f32 %v526, %v566
    %v568 = vpop.f32.mrb[0].mxu0
    %v569 = vpop.f32.mrb[0].mxu0
    %v570 = vadd.f32 %v529, %v569
    %v571 = vpop.f32.mrb[0].mxu0
    %572 = vdwg.mxu0
    %573 = vmatprep.subr.bf16.mxu0 0
    %574 = vmatpush1.bf16.msra.mxu0 %v427
    %575 = vmatprep.subr.bf16.mxu0 0
    %576 = vmatpush1.bf16.msra.mxu0 %v428
    %577 = vmatprep.subr.bf16.mxu0 0
    %578 = vmatpush1.bf16.msra.mxu0 %v429
    %579 = vmatprep.subr.bf16.mxu0 0
    %580 = vmatpush1.bf16.msra.mxu0 %v430
    %581 = vmatprep.subr.bf16.mxu0 0
    %582 = vmatpush1.bf16.msra.mxu0 %v431
    %583 = vmatprep.subr.bf16.mxu0 0
    %584 = vmatpush1.bf16.msra.mxu0 %v432
    %585 = vmatprep.subr.bf16.mxu0 0
    %586 = vmatpush1.bf16.msra.mxu0 %v433
    %587 = vmatprep.subr.bf16.mxu0 0
    %588 = vmatpush1.bf16.msra.mxu0 %v434
    %589 = vmatprep.subr.bf16.mxu0 0
    %590 = vmatpush1.bf16.msra.mxu0 %v435
    %591 = vmatprep.subr.bf16.mxu0 0
    %592 = vmatpush1.bf16.msra.mxu0 %v436
    %593 = vmatprep.subr.bf16.mxu0 0
    %594 = vmatpush1.bf16.msra.mxu0 %v437
    %595 = vmatprep.subr.bf16.mxu0 0
    %596 = vmatpush1.bf16.msra.mxu0 %v438
    %597 = vmatprep.subr.bf16.mxu0 0
    %598 = vmatpush1.bf16.msra.mxu0 %v439
    %599 = vmatprep.subr.bf16.mxu0 0
    %600 = vmatpush1.bf16.msra.mxu0 %v440
    %601 = vmatprep.subr.bf16.mxu0 0
    %602 = vmatpush1.bf16.msra.mxu0 %v441
    %603 = vmatprep.subr.bf16.mxu0 0
    %604 = vmatpush1.bf16.msra.mxu0 %v442
    %605 = vmatprep.mubr.bf16.mxu0 %v196
    %606 = vmatmul.mubr.bf16.gmra.mrb[0].mxu0 %v195
    %v607 = vpop.f32.mrb[0].mxu0
    %v608 = vadd.f32 %v567, %v607
    %v609 = vpop.f32.mrb[0].mxu0
    %v610 = vpop.f32.mrb[0].mxu0
    %v611 = vadd.f32 %v570, %v610
    %v612 = vpop.f32.mrb[0].mxu0
    %613 = vdwg.mxu0
    %v614 = vadd.f32 %v69, %v608
    %v615 = vadd.f32 %v70, %v611
    %616 = vst [vmem:[#allocation2] sm:$0xff] %v614
    %617 = vst [vmem:[#allocation2 + $0x8] sm:$0xff] %v615
    // Predicated region
    $region38: #{tpu_custom_call.1} parent=1 // pred_check
      %p618 = pneg %p63
    $region39: #{tpu_custom_call.1} parent=1 // pred_check_branch
      %620 = sbr.rel (%p618) target = $region41
    $region40: #{tpu_custom_call.1} parent=1 // pred_region
      %v621 = vld [vmem:[#allocation2] sm:$0xff]
      %v622 = vld [vmem:[#allocation2 + $0x8] sm:$0xff]
      %v623 = vld [vmem:[%s2] sm:$0x1]
      %v625 = vlaneseq
      %v626 = vshrl.u32 %v625, 7
      %v627 = vsub.s32 0, %v626
      %v628 = vrot.slane %v623, %v627
      %v630 = vadd.f32 %v621, %v628
      %v631 = vadd.f32 %v622, %v628
      %v632 = vmax.f32 %v630, 0.0
      %v633 = vmax.f32 %v631, 0.0
      %v634 = vpack.c.bf16 %v633, %v632
      %v635 = vld [vmem:[#allocation8] sm:$0xf]
      %v636 = vld [vmem:[#allocation8 + $0x4] sm:$0xf]
      %v637 = vld [vmem:[#allocation8 + $0x8] sm:$0xf]
      %v638 = vld [vmem:[#allocation8 + $0xc] sm:$0xf]
      %v639 = vld [vmem:[#allocation8 + $0x10] sm:$0xf]
      %v640 = vld [vmem:[#allocation8 + $0x14] sm:$0xf]
      %v641 = vld [vmem:[#allocation8 + $0x18] sm:$0xf]
      %v642 = vld [vmem:[#allocation8 + $0x1c] sm:$0xf]
      %v643 = vld [vmem:[#allocation8 + $0x20] sm:$0xf]
      %v644 = vld [vmem:[#allocation8 + $0x24] sm:$0xf]
      %v645 = vld [vmem:[#allocation8 + $0x28] sm:$0xf]
      %v646 = vld [vmem:[#allocation8 + $0x2c] sm:$0xf]
      %v647 = vld [vmem:[#allocation8 + $0x30] sm:$0xf]
      %v648 = vld [vmem:[#allocation8 + $0x34] sm:$0xf]
      %v649 = vld [vmem:[#allocation8 + $0x38] sm:$0xf]
      %v650 = vld [vmem:[#allocation8 + $0x3c] sm:$0xf]
      %v651 = vld [vmem:[%s4] sm:$0x1]
      %v653 = vlaneseq
      %v654 = vshrl.u32 %v653, 7
      %v655 = vsub.s32 0, %v654
      %v656 = vrot.slane %v651, %v655
      %v674 = vunpack.c.l.b16 %v635
      %v675 = vunpack.c.l.b16 %v636
      %v676 = vunpack.c.l.b16 %v637
      %v677 = vunpack.c.l.b16 %v638
      %v678 = vunpack.c.l.b16 %v639
      %v679 = vunpack.c.l.b16 %v640
      %v680 = vunpack.c.l.b16 %v641
      %v681 = vunpack.c.l.b16 %v642
      %v682 = vunpack.c.l.b16 %v643
      %v683 = vunpack.c.l.b16 %v644
      %v684 = vunpack.c.l.b16 %v645
      %v685 = vunpack.c.l.b16 %v646
      %v686 = vunpack.c.l.b16 %v647
      %v687 = vunpack.c.l.b16 %v648
      %v688 = vunpack.c.l.b16 %v649
      %v689 = vunpack.c.l.b16 %v650
      %v690 = vpack.c.b16 %v675, %v674
      %v691 = vpack.c.b16 %v677, %v676
      %v692 = vpack.c.b16 %v679, %v678
      %v693 = vpack.c.b16 %v681, %v680
      %v694 = vpack.c.b16 %v683, %v682
      %v695 = vpack.c.b16 %v685, %v684
      %v696 = vpack.c.b16 %v687, %v686
      %v697 = vpack.c.b16 %v689, %v688
      %706 = vmatprep.subr.bf16.mxu0 0
      %707 = vmatpush1.bf16.msra.mxu0 %v690
      %708 = vmatprep.subr.bf16.mxu0 0
      %709 = vmatpush1.bf16.msra.mxu0 %v691
      %710 = vmatprep.subr.bf16.mxu0 0
      %711 = vmatpush1.bf16.msra.mxu0 %v692
      %712 = vmatprep.subr.bf16.mxu0 0
      %713 = vmatpush1.bf16.msra.mxu0 %v693
      %714 = vmatprep.subr.bf16.mxu0 0
      %715 = vmatpush1.bf16.msra.mxu0 %v694
      %716 = vmatprep.subr.bf16.mxu0 0
      %717 = vmatpush1.bf16.msra.mxu0 %v695
      %718 = vmatprep.subr.bf16.mxu0 0
      %719 = vmatpush1.bf16.msra.mxu0 %v696
      %720 = vmatprep.subr.bf16.mxu0 0
      %721 = vmatpush1.bf16.msra.mxu0 %v697
      %722 = vmatprep.subr.bf16.mxu0 0
      %723 = vmatpush1.bf16.msra.mxu0 0
      %724 = vmatprep.subr.bf16.mxu0 0
      %725 = vmatpush1.bf16.msra.mxu0 0
      %726 = vmatprep.subr.bf16.mxu0 0
      %727 = vmatpush1.bf16.msra.mxu0 0
      %728 = vmatprep.subr.bf16.mxu0 0
      %729 = vmatpush1.bf16.msra.mxu0 0
      %730 = vmatprep.subr.bf16.mxu0 0
      %731 = vmatpush1.bf16.msra.mxu0 0
      %732 = vmatprep.subr.bf16.mxu0 0
      %733 = vmatpush1.bf16.msra.mxu0 0
      %734 = vmatprep.subr.bf16.mxu0 0
      %735 = vmatpush1.bf16.msra.mxu0 0
      %736 = vmatprep.subr.bf16.mxu0 0
      %737 = vmatpush1.bf16.msra.mxu0 0
      %738 = vmatprep.mubr.bf16.mxu0 0
      %739 = vmatmul.mubr.bf16.gmra.mrb[0].mxu0 %v634
      %v740 = vpop.f32.mrb[0].mxu0
      %v741 = vadd.f32 %v656, %v740
      %v742 = vpop.f32.mrb[0].mxu0
      %v743 = vpop.f32.mrb[0].mxu0
      %v744 = vadd.f32 %v656, %v743
      %v745 = vpop.f32.mrb[0].mxu0
      %746 = vdwg.mxu0
      %747 = vst [vmem:[#allocation9] sm:$0xff] %v741
      %748 = vst [vmem:[#allocation9 + $0x8] sm:$0xff] %v744
    $region41: #{tpu_custom_call.1} parent=1 // pred_fallthru
      _
    // Predicated region
    $region42: #{tpu_custom_call.1} parent=1 // pred_check
      _
    $region43: #{tpu_custom_call.1} parent=1 // pred_check_branch
      %750 = sbr.rel (0) target = $region45
    $region44: #{tpu_custom_call.1} parent=1 // pred_region
      %s752 = ssub.s32 256, 256
      %753 = vsyncadd [#allocation5], %s752
      %s754 = sshll.u32 [#allocation9], 4
      %s755 = int_to_ptr.vmem [resolvable:$true] %s754
      %760 = dma.vmem_to_hbm [thread:$0]  %s755, 256, %s5, [#allocation5], 128, 128, 8
    $region45: #{tpu_custom_call.1} parent=1 // pred_fallthru
      _
    // Predicated region
    $region46: #{tpu_custom_call.1} parent=1 // pred_check
      _
    $region47: #{tpu_custom_call.1} parent=1 // pred_check_branch
      %762 = sbr.rel (0) target = $region49
    $region48: #{tpu_custom_call.1} parent=1 // pred_region
      %763 = dma.done [#allocation5], 256
    $region49: #{tpu_custom_call.1} parent=1 // pred_fallthru
      _
    %764 = vsyncpa [#allocation4], 1
    %765 = vsyncpa [#allocation7], 1
    %766 = vsyncpa [#allocation5], 1

</llo_original>
